<compile_context>
chip_gen: v6e
topology: v6e:2x2x1
jax: 0.10.0
libtpu: 0.0.40
codegen_flags: <defaults>
</compile_context>

<pallas_src>
import functools

import jax
import jax.numpy as jnp
from jax import lax
from jax.experimental import pallas as pl
from jax.experimental.pallas import tpu as pltpu

LANES = 128
SUBLANES = 8
# Below this element count, pallas_call launch / pipeline warm-up dwarfs the
# work; XLA's fused elementwise+reduce is faster.
_MIN_PALLAS_ELEMS = 256 * 1024  # ~1 MiB of f32


def _cdiv(a, b):
    return -(-a // b)


def _detect_tensorcores_per_chip():
    """Best-effort TensorCores-per-chip (2 on v7x, 1 on v5e/v6e).

    Conservative: returns 1 whenever the toolchain does not expose an
    unambiguous *per-chip* core count, so single-TC chips never pay for a
    useless split axis.
    """
    try:
        info = pltpu.get_tpu_info()
    except Exception:
        return 1
    for name in ("tensorcores_per_chip", "num_tensorcores_per_chip",
                 "cores_per_chip", "num_cores_per_chip"):
        n = getattr(info, name, None)
        if isinstance(n, int) and n >= 1:
            return min(n, 2)
    return 1


def _charbonnier_sum_kernel(x_ref, y_ref, o_ref, *, eps2, rows_total,
                            block_rows, blocks_per_split, full_blocks,
                            need_mask):
    """Accumulate sum(sqrt((x-y)^2 + eps^2)) over this split's row blocks.

    o_ref is a (1, 8, 128) f32 block whose index is constant along the
    reduction ("arbitrary") grid axis, so it stays resident in VMEM and acts
    as a vreg-shaped accumulator fed by pure VPU adds.
    """
    step = pl.program_id(1)

    @pl.when(step == 0)
    def _():
        o_ref[...] = jnp.zeros_like(o_ref)

    d = x_ref[...].astype(jnp.float32) - y_ref[...].astype(jnp.float32)
    v = jnp.sqrt(d * d + jnp.float32(eps2))

    def fold(vv):
        # (block_rows, 128) -> (1, 8, 128) with pure VPU adds: no per-step
        # cross-lane reduce and no sub-128-lane stores in the hot loop.
        return vv.reshape(block_rows // SUBLANES, SUBLANES, LANES) \
                 .sum(axis=0).reshape(1, SUBLANES, LANES)

    if not need_mask:
        o_ref[...] += fold(v)
    else:
        # Unclamped logical block id (the index_map clamps duplicated tail
        # slots onto the last valid block; the mask below zeroes them).
        blk = pl.program_id(0) * blocks_per_split + step

        @pl.when(blk < full_blocks)
        def _():
            # Full block: no masking cost.
            o_ref[...] += fold(v)

        @pl.when(blk >= full_blocks)
        def _():
            # Partial or duplicated block: true select (NOT multiply-by-mask)
            # so garbage/NaN rows in the padded region never propagate.
            row0 = blk * block_rows
            row_ids = row0 + lax.broadcasted_iota(jnp.int32, (block_rows, 1), 0)
            o_ref[...] += fold(jnp.where(row_ids < rows_total, v,
                                         jnp.float32(0.0)))


def _charbonnier_value(x, y, eps, max_block_rows, num_splits, force_pallas):
    assert x.shape == y.shape, "x and y must have the same shape"
    total = x.size
    eps2 = float(eps) * float(eps)

    use_pallas = (total > 0 and total % LANES == 0
                  and (force_pallas or total >= _MIN_PALLAS_ELEMS))
    if not use_pallas:
        # Small inputs: launch overhead dominates.  Ragged sizes: a lane-dense
        # (rows, 128) view would require a prefix-slice copy (a full extra HBM
        # pass over both inputs), so the single-pass fused XLA op is faster.
        d = x.astype(jnp.float32) - y.astype(jnp.float32)
        return jnp.mean(jnp.sqrt(d * d + jnp.float32(eps2)))

    rows_total = total // LANES
    x2 = jnp.ravel(x).reshape(rows_total, LANES)   # free view, no copy
    y2 = jnp.ravel(y).reshape(rows_total, LANES)

    # Largest multiple-of-8 row block <= max_block_rows (and <= the input).
    block_rows = min(int(max_block_rows), (rows_total // SUBLANES) * SUBLANES)
    block_rows = max(SUBLANES, block_rows)
    num_blocks = _cdiv(rows_total, block_rows)
    full_blocks = rows_total // block_rows          # blocks with no ragged rows

    detected_cores = _detect_tensorcores_per_chip()
    splits = detected_cores if num_splits is None else int(num_splits)
    splits = max(1, min(splits, num_blocks))
    blocks_per_split = _cdiv(num_blocks, splits)
    need_mask = (rows_total % block_rows != 0) or \
                (splits * blocks_per_split != num_blocks)
    last_block = num_blocks - 1

    def in_map(c, i):
        # Clamp duplicated tail slots onto the last valid block; the kernel's
        # row mask zeroes their contribution.
        return (jnp.minimum(c * blocks_per_split + i, last_block), 0)

    kernel = functools.partial(
        _charbonnier_sum_kernel,
        eps2=eps2,
        rows_total=rows_total,
        block_rows=block_rows,
        blocks_per_split=blocks_per_split,
        full_blocks=full_blocks,
        need_mask=need_mask,
    )

    # Leading-axis semantics: CORE_PARALLEL only when we actually have that
    # many TensorCores (v7x); otherwise plain parallel/arbitrary.
    if splits > 1 and detected_cores >= splits:
        lead_sem = pltpu.CORE_PARALLEL
    elif splits > 1:
        lead_sem = pltpu.PARALLEL
    else:
        lead_sem = pltpu.ARBITRARY

    partials = pl.pallas_call(
        kernel,
        out_shape=jax.ShapeDtypeStruct((splits, SUBLANES, LANES), jnp.float32),
        grid_spec=pltpu.PrefetchScalarGridSpec(
            num_scalar_prefetch=0,
            grid=(splits, blocks_per_split),
            in_specs=[
                pl.BlockSpec((block_rows, LANES), in_map),
                pl.BlockSpec((block_rows, LANES), in_map),
            ],
            out_specs=pl.BlockSpec((1, SUBLANES, LANES), lambda c, i: (c, 0, 0)),
        ),
        compiler_params=pltpu.CompilerParams(
            dimension_semantics=(lead_sem, pltpu.ARBITRARY),
        ),
    )(x2, y2)

    return jnp.sum(partials) / jnp.float32(total)


@functools.partial(jax.custom_vjp, nondiff_argnums=(2, 3, 4, 5))
def _charbonnier(x, y, eps, max_block_rows, num_splits, force_pallas):
    return _charbonnier_value(x, y, eps, max_block_rows, num_splits, force_pallas)


def _charbonnier_fwd(x, y, eps, max_block_rows, num_splits, force_pallas):
    loss = _charbonnier_value(x, y, eps, max_block_rows, num_splits, force_pallas)
    return loss, (x, y)


def _charbonnier_bwd(eps, max_block_rows, num_splits, force_pallas, res, g):
    # d/dx mean(sqrt(d^2 + eps^2)) = d / sqrt(d^2 + eps^2) / N (elementwise);
    # plain fused XLA is already memory-bound optimal for this.
    x, y = res
    d = x.astype(jnp.float32) - y.astype(jnp.float32)
    denom = jnp.sqrt(d * d + jnp.float32(float(eps) * float(eps)))
    n = max(x.size, 1)
    gx = g * d / denom / jnp.float32(n)
    return gx.astype(x.dtype), (-gx).astype(y.dtype)


_charbonnier.defvjp(_charbonnier_fwd, _charbonnier_bwd)


def charbonnier_loss(x, y, eps=1e-3, *, max_block_rows=4096, num_splits=None,
                     force_pallas=False):
    """JAX/Pallas equivalent of CharbonnierLoss(eps).forward(x, y)."""
    return _charbonnier(x, y, float(eps), int(max_block_rows),
                        None if num_splits is None else int(num_splits),
                        bool(force_pallas))


def charbonnier_loss_ref(x, y, eps=1e-3):
    d = x.astype(jnp.float32) - y.astype(jnp.float32)
    return jnp.mean(jnp.sqrt(d * d + jnp.float32(eps) * jnp.float32(eps)))


if __name__ == "__main__":
    key = jax.random.PRNGKey(0)
    k1, k2, k3, k4, k5, k6 = jax.random.split(key, 6)

    # 1) Small NCHW input, as the PyTorch module would see it: (2, 4, 16, 16).
    #    Routed through the small-input fast path.
    x_s = jax.random.normal(k1, (2, 4, 16, 16), dtype=jnp.float32)
    y_s = jax.random.normal(k2, (2, 4, 16, 16), dtype=jnp.float32)
    ref_s = charbonnier_loss_ref(x_s, y_s)
    out_s = jax.block_until_ready(charbonnier_loss(x_s, y_s))
    assert jnp.allclose(out_s, ref_s, rtol=1e-5, atol=1e-6), (out_s, ref_s)

    # 2) Same input forced through the Pallas kernel (single full block).
    out_k = jax.block_until_ready(charbonnier_loss(x_s, y_s, force_pallas=True))
    assert jnp.allclose(out_k, ref_s, rtol=1e-5, atol=1e-6), (out_k, ref_s)

    # 3) Multi-block kernel path with a partial (masked) last block and the
    #    resident accumulator: 2*4*40*40 = 12800 elems -> 100 rows, 32-row blocks.
    x_m = jax.random.normal(k3, (2, 4, 40, 40), dtype=jnp.float32)
    y_m = jax.random.normal(k4, (2, 4, 40, 40), dtype=jnp.float32)
    ref_m = charbonnier_loss_ref(x_m, y_m)
    out_m = jax.block_until_ready(
        charbonnier_loss(x_m, y_m, max_block_rows=32, force_pallas=True))
    assert jnp.allclose(out_m, ref_m, rtol=1e-5, atol=1e-6), (out_m, ref_m)

    # 4) Ragged element count (not a multiple of 128) -> fused XLA path.
    x_r = jax.random.normal(k5, (3, 5, 7, 11), dtype=jnp.float32)
    y_r = jax.random.normal(k6, (3, 5, 7, 11), dtype=jnp.float32)
    out_r = jax.block_until_ready(charbonnier_loss(x_r, y_r))
    ref_r = charbonnier_loss_ref(x_r, y_r)
    assert jnp.allclose(out_r, ref_r, rtol=1e-5, atol=1e-6), (out_r, ref_r)

    # 5) Gradient through the custom VJP matches autodiff of the reference.
    g = jax.block_until_ready(jax.grad(lambda a, b: charbonnier_loss(a, b))(x_s, y_s))
    g_ref = jax.grad(lambda a, b: charbonnier_loss_ref(a, b))(x_s, y_s)
    assert jnp.allclose(g, g_ref, rtol=1e-5, atol=1e-6), "grad mismatch"

    print("KERNEL_OK")
</pallas_src>

<mosaic_0001>
module attributes {stable_mosaic.version = 11 : i64} {
  func.func @_charbonnier_sum_kernel(%arg0: i32, %arg1: i32, %arg2: memref<16x128xf32, #tpu.memory_space<vmem>>, %arg3: memref<16x128xf32, #tpu.memory_space<vmem>>, %arg4: memref<1x8x128xf32, #tpu.memory_space<vmem>>) attributes {dimension_semantics = [#tpu.dimension_semantics<arbitrary>, #tpu.dimension_semantics<arbitrary>], iteration_bounds = array<i64: 1, 1>, scalar_prefetch = 0 : i64, scratch_operands = 0 : i64, tpu.core_type = #tpu.core_type<tc>, window_params = [{transform_indices = @transform_0, window_bounds = array<i64: 16, 128>}, {transform_indices = @transform_1, window_bounds = array<i64: 16, 128>}, {transform_indices = @transform_2, window_bounds = array<i64: 1, 8, 128>}]} {
    %c0_i32 = arith.constant 0 : i32
    %0 = arith.cmpi eq, %arg1, %c0_i32 : i32
    %1 = arith.extui %0 : i1 to i32
    %c0_i32_0 = arith.constant 0 : i32
    %2 = arith.cmpi ne, %1, %c0_i32_0 : i32
    scf.if %2 {
      %cst_11 = arith.constant 0.000000e+00 : f32
      %16 = vector.broadcast %cst_11 : f32 to vector<1x8x128xf32>
      %c0_12 = arith.constant 0 : index
      %c0_13 = arith.constant 0 : index
      %c0_14 = arith.constant 0 : index
      %17 = vector.load %arg4[%c0_12, %c0_13, %c0_14] : memref<1x8x128xf32, #tpu.memory_space<vmem>>, vector<1x8x128xf32>
      tpu.vector_store %arg4[%c0_12, %c0_13, %c0_14], %16 {strides = array<i32>} : memref<1x8x128xf32, #tpu.memory_space<vmem>>, vector<1x8x128xf32>,
    } else {
    }
    %c0 = arith.constant 0 : index
    %c0_1 = arith.constant 0 : index
    %3 = vector.load %arg2[%c0, %c0_1] : memref<16x128xf32, #tpu.memory_space<vmem>>, vector<16x128xf32>
    %c0_2 = arith.constant 0 : index
    %c0_3 = arith.constant 0 : index
    %4 = vector.load %arg3[%c0_2, %c0_3] : memref<16x128xf32, #tpu.memory_space<vmem>>, vector<16x128xf32>
    %5 = arith.subf %3, %4 : vector<16x128xf32>
    %6 = arith.mulf %5, %5 : vector<16x128xf32>
    %cst = arith.constant 9.99999997E-7 : f32
    %7 = vector.broadcast %cst : f32 to vector<16x128xf32>
    %8 = arith.addf %6, %7 : vector<16x128xf32>
    %9 = math.sqrt %8 : vector<16x128xf32>
    %c0_4 = arith.constant 0 : index
    %c0_5 = arith.constant 0 : index
    %c0_6 = arith.constant 0 : index
    %10 = vector.load %arg4[%c0_4, %c0_5, %c0_6] : memref<1x8x128xf32, #tpu.memory_space<vmem>>, vector<1x8x128xf32>
    %11 = vector.shape_cast %9 : vector<16x128xf32> to vector<2x8x128xf32>
    %cst_7 = arith.constant dense<0.000000e+00> : vector<8x128xf32>
    %12 = vector.multi_reduction <add>, %11, %cst_7 [0] : vector<2x8x128xf32> to vector<8x128xf32>
    %13 = vector.shape_cast %12 : vector<8x128xf32> to vector<1x8x128xf32>
    %14 = arith.addf %10, %13 : vector<1x8x128xf32>
    %c0_8 = arith.constant 0 : index
    %c0_9 = arith.constant 0 : index
    %c0_10 = arith.constant 0 : index
    %15 = vector.load %arg4[%c0_8, %c0_9, %c0_10] : memref<1x8x128xf32, #tpu.memory_space<vmem>>, vector<1x8x128xf32>
    tpu.vector_store %arg4[%c0_8, %c0_9, %c0_10], %14 {strides = array<i32>} : memref<1x8x128xf32, #tpu.memory_space<vmem>>, vector<1x8x128xf32>,
    return
  }
  func.func @transform_0(%arg0: i32, %arg1: i32) -> (i32, i32) {
    %c1_i32 = arith.constant 1 : i32
    %0 = arith.muli %arg0, %c1_i32 : i32
    %1 = arith.addi %0, %arg1 : i32
    %c0_i32 = arith.constant 0 : i32
    %2 = arith.minsi %1, %c0_i32 : i32
    %c0_i32_0 = arith.constant 0 : i32
    %c0_i32_1 = arith.constant 0 : i32
    return %2, %c0_i32_0 : i32, i32
  }
  func.func @transform_1(%arg0: i32, %arg1: i32) -> (i32, i32) {
    %c1_i32 = arith.constant 1 : i32
    %0 = arith.muli %arg0, %c1_i32 : i32
    %1 = arith.addi %0, %arg1 : i32
    %c0_i32 = arith.constant 0 : i32
    %2 = arith.minsi %1, %c0_i32 : i32
    %c0_i32_0 = arith.constant 0 : i32
    %c0_i32_1 = arith.constant 0 : i32
    return %2, %c0_i32_0 : i32, i32
  }
  func.func @transform_2(%arg0: i32, %arg1: i32) -> (i32, i32, i32) {
    %c0_i32 = arith.constant 0 : i32
    %c0_i32_0 = arith.constant 0 : i32
    %c0_i32_1 = arith.constant 0 : i32
    return %arg0, %c0_i32, %c0_i32_0 : i32, i32, i32
  }
}

</mosaic_0001>

<llo_original>
// kernel: tpu_custom_call.1
$region0: #{tpu_custom_call.1}
  #allocation0 [shape = 'u32[]', space=smem, size = 0x4, offset = 0x4, fixed_abs, tag = 'smem constant byte address 0x4 - core index']
  #allocation1 [shape = 'u32[144,128]{1,0:T(1,128)}', space=vmem, size = 0x12000, scoped, tag = 'internal scratch']
  %s0 = inlined_call_operand.hbm [shape: f32[16,128], index: 0, kind: input, shape index: {}]
  %s1 = inlined_call_operand.hbm [shape: f32[16,128], index: 1, kind: input, shape index: {}]
  %s2 = inlined_call_operand.hbm [shape: f32[1,8,128], index: 2, kind: output, shape index: {}]
  %s3 = sld [smem:[#allocation0]]
  $region30: #{tpu_custom_call.1} parent=0
    _
  %s5 = ssub.s32 1, %s3
  %s6 = scalar_select 0, %s5, %s3
  $region1: #{tpu_custom_call.1} parent=0
    #allocation2 [shape = 'u8[8192]{0}', space=vmem, size = 0x2000, scoped, tag = 'input window, operand 0, single buffered']
    #allocation3 [shape = 's32[1]{0}', space=sflag, size = 0x4, scoped, tag = 'scoped memory for tpu_custom_call.1']
    #allocation4 [shape = 's32[1]{0}', space=sflag, size = 0x4, scoped, tag = 'scoped memory for tpu_custom_call.1']
    #allocation5 [shape = 'u8[8192]{0}', space=vmem, size = 0x2000, scoped, tag = 'input window, operand 1, single buffered']
    #allocation6 [shape = 's32[1]{0}', space=sflag, size = 0x4, scoped, tag = 'scoped memory for tpu_custom_call.1']
    #allocation7 [shape = 'u8[4096]{0}', space=vmem, size = 0x1000, scoped, tag = 'output window, operand 0, single buffered']
    %7 = vsyncpa [#allocation3], 0
    %8 = vsyncpa [#allocation6], 0
    %9 = vsyncpa [#allocation4], 0
    // Predicated region
    $region2: #{tpu_custom_call.1} parent=1 // pred_check
      _
    $region3: #{tpu_custom_call.1} parent=1 // pred_check_branch
      %11 = sbr.rel (0) target = $region5
    $region4: #{tpu_custom_call.1} parent=1 // pred_region
      %s12 = sadd.s32 0, 0
      %p13 = scmp.lt.s32.totalorder %s12, 0
      %s14 = scalar_select %p13, %s12, 0
      %s15 = smul.u32 2, %s14
      %s17 = ssub.s32 256, 256
      %18 = vsyncadd [#allocation3], %s17
      %s19 = smul.addr %s15, 128
      %s20 = scalar_lea.hbm %s0, %s19
      %s21 = sshll.u32 [#allocation2], 4
      %s22 = int_to_ptr.vmem [resolvable:$true] %s21
      %27 = dma.hbm_to_vmem [thread:$0]  %s20, 256, %s22, [#allocation3], 128, 128, 8
    $region5: #{tpu_custom_call.1} parent=1 // pred_fallthru
      _
    // Predicated region
    $region6: #{tpu_custom_call.1} parent=1 // pred_check
      _
    $region7: #{tpu_custom_call.1} parent=1 // pred_check_branch
      %29 = sbr.rel (0) target = $region9
    $region8: #{tpu_custom_call.1} parent=1 // pred_region
      %s30 = sadd.s32 0, 0
      %p31 = scmp.lt.s32.totalorder %s30, 0
      %s32 = scalar_select %p31, %s30, 0
      %s33 = smul.u32 2, %s32
      %s35 = ssub.s32 256, 256
      %36 = vsyncadd [#allocation6], %s35
      %s37 = smul.addr %s33, 128
      %s38 = scalar_lea.hbm %s1, %s37
      %s39 = sshll.u32 [#allocation5], 4
      %s40 = int_to_ptr.vmem [resolvable:$true] %s39
      %45 = dma.hbm_to_vmem [thread:$0]  %s38, 256, %s40, [#allocation6], 128, 128, 8
    $region9: #{tpu_custom_call.1} parent=1 // pred_fallthru
      _
    // Predicated region
    $region10: #{tpu_custom_call.1} parent=1 // pred_check
      _
    $region11: #{tpu_custom_call.1} parent=1 // pred_check_branch
      %47 = sbr.rel (0) target = $region13
    $region12: #{tpu_custom_call.1} parent=1 // pred_region
      %48 = dma.done [#allocation3], 256
    $region13: #{tpu_custom_call.1} parent=1 // pred_fallthru
      _
    // Predicated region
    $region14: #{tpu_custom_call.1} parent=1 // pred_check
      _
    $region15: #{tpu_custom_call.1} parent=1 // pred_check_branch
      %50 = sbr.rel (0) target = $region17
    $region16: #{tpu_custom_call.1} parent=1 // pred_region
      %51 = dma.done [#allocation6], 256
    $region17: #{tpu_custom_call.1} parent=1 // pred_fallthru
      _
    %s52 = sadd.s32 0, 0
    %p53 = scmp.lt.s32.totalorder %s52, 0
    %s54 = scalar_select %p53, %s52, 0
    %s55 = smul.u32 2, %s54
    %s56 = sadd.s32 0, 0
    %p57 = scmp.lt.s32.totalorder %s56, 0
    %s58 = scalar_select %p57, %s56, 0
    %s59 = smul.u32 2, %s58
    %p60 = scmp.eq.s32.totalorder 0, 0
    // Predicated region
    $region18: #{tpu_custom_call.1} parent=1 // pred_check
      %p61 = pneg %p60
    $region19: #{tpu_custom_call.1} parent=1 // pred_check_branch
      %63 = sbr.rel (%p61) target = $region21
    $region20: #{tpu_custom_call.1} parent=1 // pred_region
      %64 = vst [vmem:[#allocation7] sm:$0xff] 0.0
    $region21: #{tpu_custom_call.1} parent=1 // pred_fallthru
      _
    %v65 = vld [vmem:[#allocation2] sm:$0xff]
    %v66 = vld [vmem:[#allocation2 + $0x8] sm:$0xff]
    %v67 = vld [vmem:[#allocation5] sm:$0xff]
    %v68 = vld [vmem:[#allocation5 + $0x8] sm:$0xff]
    %v69 = vsub.f32 %v65, %v67
    %v70 = vsub.f32 %v66, %v68
    %v71 = vmul.f32 %v69, %v69
    %v72 = vmul.f32 %v70, %v70
    %v73 = vadd.f32 %v71, 1e-06
    %v74 = vadd.f32 %v72, 1e-06
    %v75 = vrsqrt.pop %v73
    %v76 = vmul.f32 %v73, %v75
    %vm77 = vcmp.eq.f32.partialorder %v73, inf
    %v78 = vsel %vm77, %v73, %v76
    %vm79 = vcmp.eq.f32.partialorder %v73, 0.0
    %v80 = vand.u32 %v73, 2147483648
    %v81 = vsel %vm79, %v80, %v78
    %v82 = vrsqrt.pop %v74
    %v83 = vmul.f32 %v74, %v82
    %vm84 = vcmp.eq.f32.partialorder %v74, inf
    %v85 = vsel %vm84, %v74, %v83
    %vm86 = vcmp.eq.f32.partialorder %v74, 0.0
    %v87 = vand.u32 %v74, 2147483648
    %v88 = vsel %vm86, %v87, %v85
    %v89 = vld [vmem:[#allocation7] sm:$0xff]
    %v90 = vadd.f32 %v81, %v88
    %v91 = vadd.f32 %v89, %v90
    %92 = vst [vmem:[#allocation7] sm:$0xff] %v91
    // Predicated region
    $region22: #{tpu_custom_call.1} parent=1 // pred_check
      _
    $region23: #{tpu_custom_call.1} parent=1 // pred_check_branch
      %94 = sbr.rel (0) target = $region25
    $region24: #{tpu_custom_call.1} parent=1 // pred_region
      %s96 = ssub.s32 128, 128
      %97 = vsyncadd [#allocation4], %s96
      %s99 = sshll.u32 [#allocation7], 4
      %s100 = int_to_ptr.vmem [resolvable:$true] %s99
      %102 = dma.vmem_to_hbm [thread:$0]  %s100, 128, %s2, [#allocation4]
    $region25: #{tpu_custom_call.1} parent=1 // pred_fallthru
      _
    // Predicated region
    $region26: #{tpu_custom_call.1} parent=1 // pred_check
      _
    $region27: #{tpu_custom_call.1} parent=1 // pred_check_branch
      %104 = sbr.rel (0) target = $region29
    $region28: #{tpu_custom_call.1} parent=1 // pred_region
      %105 = dma.done [#allocation4], 128
    $region29: #{tpu_custom_call.1} parent=1 // pred_fallthru
      _
    %106 = vsyncpa [#allocation3], 1
    %107 = vsyncpa [#allocation6], 1
    %108 = vsyncpa [#allocation4], 1

</llo_original>
